<compile_context>
chip_gen: v7x
topology: tpu7x:2x2x1
jax: 0.10.0
libtpu: 0.0.40
codegen_flags: <defaults>
</compile_context>

<pallas_src>
import jax
import jax.numpy as jnp
import numpy as np
from jax.experimental import pallas as pl
from jax.experimental.pallas import tpu as pltpu

C_OUT = 32
KH = KW = 3
H = W = 28                  # spatial size implied by fc1 in_features = 32*14*14
HP = WP = 14                # after 2x2/2 max pool
WLANE = 512                 # lanes per pool parity: w'*32+c uses 448 of 512 (padded to 4x128)
CONV_LANES = 2 * WLANE      # 1024 = 8 lane groups, col = parity*512 + w'*32 + c
KLANES = KH * 32            # 96: merged conv contraction (3 input rows, each padded to 32 lanes)
OUT_LANES = 128             # lane-dense fc2 output (num_classes padded with zero columns)


def fused_cnn_kernel(x_ref, mconv_ref, bconv_ref, w1_ref, b1_ref, w2_ref, b2_ref, o_ref):
    # x_ref:     (28, BB, 96)  bf16  lane ky*32+w = zero-padded input row h+ky, col w
    # mconv_ref: (96, 1024)    bf16  merged Toeplitz conv weights
    # bconv_ref: (1, 1024)     f32   conv bias in the same lane layout (pad lanes = 0)
    # w1_ref:    (14, 512, Hp) bf16  fc1 weights permuted to (h', w'*32+c) rows, pad rows = 0
    # b1_ref:    (1, Hp) f32;  w2_ref: (Hp, 128) bf16;  b2_ref: (1, 128) f32;  o_ref: (BB, 128) f32
    bb = x_ref.shape[1]
    hidden = w1_ref.shape[2]

    def conv_relu_row(h):
        # one conv output row h for all samples/channels/widths: (bb,96)@(96,1024), lane-dense
        s = jnp.dot(x_ref[h], mconv_ref[...], preferred_element_type=jnp.float32)
        return jnp.maximum(s + bconv_ref[...], 0.0)

    def body(hp, acc):
        r = jnp.maximum(conv_relu_row(2 * hp), conv_relu_row(2 * hp + 1))   # 2x1 h-pair pool
        pooled = jnp.maximum(r[:, :WLANE], r[:, WLANE:])                    # 1x2 w-pair pool
        return acc + jnp.dot(pooled.astype(jnp.bfloat16), w1_ref[hp],
                             preferred_element_type=jnp.float32)            # fc1 partial (f32 acc)

    acc = jax.lax.fori_loop(0, HP, body, jnp.zeros((bb, hidden), jnp.float32))
    h1 = jnp.maximum(acc + b1_ref[...], 0.0)
    # TODO(synk): nn.Dropout is identity in eval/inference mode; not applied here.
    out = jnp.dot(h1.astype(jnp.bfloat16), w2_ref[...],
                  preferred_element_type=jnp.float32) + b2_ref[...]
    o_ref[...] = out.astype(o_ref.dtype)


def prepare_params(conv_w_oihw, conv_b, w1, b1, w2, b2):
    """One-time host-side re-layout of the PyTorch-style parameters."""
    wc = np.asarray(conv_w_oihw, np.float32)[:, 0]            # (32, 3, 3)
    # Merged Toeplitz conv weight: conv row h = xrep[h] @ m_conv, xrep lane ky*32+w = xpad[h+ky, w]
    m_conv = np.zeros((KLANES, CONV_LANES), np.float32)
    b_conv_t = np.zeros((1, CONV_LANES), np.float32)
    bc = np.asarray(conv_b, np.float32)
    for wout in range(W):
        wp, parity = divmod(wout, 2)
        col = parity * WLANE + wp * C_OUT
        b_conv_t[0, col:col + C_OUT] = bc
        for ky in range(KH):
            for kx in range(KW):
                m_conv[ky * 32 + wout + kx, col:col + C_OUT] = wc[:, ky, kx]
    # fc1 weights: PyTorch flatten order is (c, h', w'); kernel rows are (h', w'*32 + c).
    hidden = w1.shape[1]
    hidden_pad = 128 * ((hidden + 127) // 128)
    nc = np.asarray(w2).shape[1]
    w1_chw = np.asarray(w1, np.float32).reshape(C_OUT, HP, WP, hidden)
    w1_hwc = np.transpose(w1_chw, (1, 2, 0, 3)).reshape(HP, WP * C_OUT, hidden)
    w1p = np.zeros((HP, WLANE, hidden_pad), np.float32)
    w1p[:, :WP * C_OUT, :hidden] = w1_hwc
    b1p = np.zeros((1, hidden_pad), np.float32)
    b1p[0, :hidden] = np.asarray(b1, np.float32)
    w2p = np.zeros((hidden_pad, OUT_LANES), np.float32)      # zero cols/rows -> lane-dense output
    w2p[:hidden, :nc] = np.asarray(w2, np.float32)
    b2p = np.zeros((1, OUT_LANES), np.float32)
    b2p[0, :nc] = np.asarray(b2, np.float32)
    return (
        jnp.asarray(m_conv, dtype=jnp.bfloat16),
        jnp.asarray(b_conv_t),
        jnp.asarray(w1p, dtype=jnp.bfloat16),
        jnp.asarray(b1p),
        jnp.asarray(w2p, dtype=jnp.bfloat16),
        jnp.asarray(b2p),
        nc,
    )


def _pick_block_b(batch, block_b):
    # bf16 input blocks: keep the second-minor (batch) block a multiple of 16 sublanes.
    bb = min(block_b, 16 * pl.cdiv(batch, 16))
    bb = max(16, (bb // 16) * 16)
    # Prefer >=2 grid steps so v7x's 2 TensorCores (grid axis is "parallel") both get work.
    while bb > 16 and pl.cdiv(batch, bb) < 2:
        bb = max(16, ((bb // 2) // 16) * 16)
    return bb


def _prep_input(x, b_pad):
    """(B,1,28,28) f32 -> (28, b_pad, 96) bf16 with lane ky*32+w = zero-padded row h+ky, col w."""
    B = x.shape[0]
    xp = jnp.pad(x[:, 0].astype(jnp.float32), ((0, b_pad - B), (1, 1), (1, 1)))   # (b_pad,30,30)
    taps = jnp.arange(H)[:, None] + jnp.arange(KH)[None, :]                       # (28,3) in 0..29
    xr = xp[:, taps, :]                                                           # (b_pad,28,3,30)
    xr = jnp.pad(xr, ((0, 0), (0, 0), (0, 0), (0, 32 - (W + 2))))                 # pad 30 -> 32
    xr = jnp.transpose(xr, (1, 0, 2, 3)).reshape(H, b_pad, KLANES)
    return xr.astype(jnp.bfloat16)


def cnn_forward(x, params, block_b=64):
    m_conv, b_conv_t, w1p, b1p, w2p, b2p, nc = params
    B = x.shape[0]
    bb = _pick_block_b(B, block_b)
    nb = pl.cdiv(B, bb)
    b_pad = nb * bb
    hidden_pad = w1p.shape[2]

    xrep = _prep_input(x, b_pad)    # tiny host-side relayout; replaces any in-kernel transpose

    out = pl.pallas_call(
        fused_cnn_kernel,
        out_shape=jax.ShapeDtypeStruct((b_pad, OUT_LANES), jnp.float32),
        grid=(nb,),
        in_specs=[
            pl.BlockSpec((H, bb, KLANES), lambda i: (0, i, 0)),        # input block (per step)
            pl.BlockSpec((KLANES, CONV_LANES), lambda i: (0, 0)),      # conv Toeplitz (resident)
            pl.BlockSpec((1, CONV_LANES), lambda i: (0, 0)),           # conv bias
            pl.BlockSpec((HP, WLANE, hidden_pad), lambda i: (0, 0, 0)),  # fc1 weights (resident)
            pl.BlockSpec((1, hidden_pad), lambda i: (0, 0)),           # fc1 bias
            pl.BlockSpec((hidden_pad, OUT_LANES), lambda i: (0, 0)),   # fc2 weights
            pl.BlockSpec((1, OUT_LANES), lambda i: (0, 0)),            # fc2 bias
        ],
        out_specs=pl.BlockSpec((bb, OUT_LANES), lambda i: (i, 0)),
        compiler_params=pltpu.CompilerParams(dimension_semantics=("parallel",)),
    )(xrep, m_conv, b_conv_t, w1p, b1p, w2p, b2p)
    return out[:B, :nc]


def reference_forward(x, w_oihw, b_conv, w1, b1, w2, b2):
    y = jax.lax.conv_general_dilated(
        x, w_oihw, window_strides=(1, 1), padding="SAME",
        dimension_numbers=("NCHW", "OIHW", "NCHW"))
    y = jnp.maximum(y + b_conv[None, :, None, None], 0.0)
    y = jax.lax.reduce_window(y, -jnp.inf, jax.lax.max,
                              (1, 1, 2, 2), (1, 1, 2, 2), "VALID")
    flat = y.reshape(x.shape[0], -1)
    h = jnp.maximum(flat @ w1 + b1, 0.0)
    return h @ w2 + b2


if __name__ == "__main__":
    key = jax.random.PRNGKey(0)
    kx, kw, kb, k1, kb1, k2, kb2 = jax.random.split(key, 7)
    B, hidden_units, num_classes = 2, 128, 10

    x = jax.random.normal(kx, (B, 1, 28, 28), jnp.float32)
    w_conv = jax.random.normal(kw, (C_OUT, 1, 3, 3), jnp.float32) * 0.1    # PyTorch OIHW layout
    b_conv = jax.random.normal(kb, (C_OUT,), jnp.float32) * 0.1
    F = C_OUT * HP * WP                                                    # 32 * 14 * 14 = 6272
    w1 = jax.random.normal(k1, (F, hidden_units), jnp.float32) * 0.02
    b1 = jax.random.normal(kb1, (hidden_units,), jnp.float32) * 0.02
    w2 = jax.random.normal(k2, (hidden_units, num_classes), jnp.float32) * 0.1
    b2 = jax.random.normal(kb2, (num_classes,), jnp.float32) * 0.1

    params = prepare_params(w_conv, b_conv, w1, b1, w2, b2)
    out = jax.block_until_ready(cnn_forward(x, params))

    ref = reference_forward(x, w_conv, b_conv, w1, b1, w2, b2)
    assert out.shape == (B, num_classes), out.shape
    max_err = float(jnp.max(jnp.abs(out - ref)))
    # conv/fc1/fc2 operands are bf16 with f32 accumulation; tolerance sized for that, still far
    # below the ~0.3-1.0 error a wrong weight permutation would produce.
    assert jnp.allclose(out, ref, atol=3e-2, rtol=3e-2), max_err
    print("KERNEL_OK")
</pallas_src>

<mosaic_0001>
module attributes {stable_mosaic.version = 11 : i64} {
  func.func @fused_cnn_kernel(%arg0: i32, %arg1: memref<28x16x96xbf16, #tpu.memory_space<vmem>>, %arg2: memref<96x1024xbf16, #tpu.memory_space<vmem>>, %arg3: memref<1x1024xf32, #tpu.memory_space<vmem>>, %arg4: memref<14x512x128xbf16, #tpu.memory_space<vmem>>, %arg5: memref<1x128xf32, #tpu.memory_space<vmem>>, %arg6: memref<128x128xbf16, #tpu.memory_space<vmem>>, %arg7: memref<1x128xf32, #tpu.memory_space<vmem>>, %arg8: memref<16x128xf32, #tpu.memory_space<vmem>>) attributes {dimension_semantics = [#tpu.dimension_semantics<parallel>], iteration_bounds = array<i64: 1>, scalar_prefetch = 0 : i64, scratch_operands = 0 : i64, tpu.core_type = #tpu.core_type<tc>, window_params = [{transform_indices = @transform_0, window_bounds = array<i64: 28, 16, 96>}, {pipeline_mode = #tpu.pipeline_mode<synchronous>, transform_indices = @transform_1, window_bounds = array<i64: 96, 1024>}, {pipeline_mode = #tpu.pipeline_mode<synchronous>, transform_indices = @transform_2, window_bounds = array<i64: 1, 1024>}, {pipeline_mode = #tpu.pipeline_mode<synchronous>, transform_indices = @transform_3, window_bounds = array<i64: 14, 512, 128>}, {pipeline_mode = #tpu.pipeline_mode<synchronous>, transform_indices = @transform_4, window_bounds = array<i64: 1, 128>}, {pipeline_mode = #tpu.pipeline_mode<synchronous>, transform_indices = @transform_5, window_bounds = array<i64: 128, 128>}, {pipeline_mode = #tpu.pipeline_mode<synchronous>, transform_indices = @transform_6, window_bounds = array<i64: 1, 128>}, {transform_indices = @transform_7, window_bounds = array<i64: 16, 128>}]} {
    %cst = arith.constant 0.000000e+00 : f32
    %0 = vector.broadcast %cst : f32 to vector<16x128xf32>
    %c0_i32 = arith.constant 0 : i32
    %c14_i32 = arith.constant 14 : i32
    %1 = arith.addi %c0_i32, %c14_i32 : i32
    %c1_i32 = arith.constant 1 : i32
    %2 = scf.for %arg9 = %c0_i32 to %1 step %c1_i32 iter_args(%arg10 = %0) -> (vector<16x128xf32>)  : i32 {
      %c2_i32 = arith.constant 2 : i32
      %15 = arith.muli %c2_i32, %arg9 : i32
      %16 = arith.index_cast %15 : i32 to index
      %c0_10 = arith.constant 0 : index
      %c0_11 = arith.constant 0 : index
      %17 = vector.load %arg1[%16, %c0_10, %c0_11] : memref<28x16x96xbf16, #tpu.memory_space<vmem>>, vector<1x16x96xbf16>
      %18 = vector.shape_cast %17 : vector<1x16x96xbf16> to vector<16x96xbf16>
      %c0_12 = arith.constant 0 : index
      %c0_13 = arith.constant 0 : index
      %19 = vector.load %arg2[%c0_12, %c0_13] : memref<96x1024xbf16, #tpu.memory_space<vmem>>, vector<96x1024xbf16>
      %cst_14 = arith.constant dense<0.000000e+00> : vector<16x1024xf32>
      %20 = tpu.matmul %18, %19, %cst_14 {dimension_numbers = #tpu.dot_dimension_numbers<[1], [0], [0], [1], [0, 0, 1, 1], [], []>} : vector<16x96xbf16>, vector<96x1024xbf16>, vector<16x1024xf32> -> vector<16x1024xf32>
      %c0_15 = arith.constant 0 : index
      %c0_16 = arith.constant 0 : index
      %21 = vector.load %arg3[%c0_15, %c0_16] : memref<1x1024xf32, #tpu.memory_space<vmem>>, vector<1x1024xf32>
      %22 = vector.broadcast %21 : vector<1x1024xf32> to vector<16x1024xf32>
      %23 = arith.addf %20, %22 : vector<16x1024xf32>
      %cst_17 = arith.constant 0.000000e+00 : f32
      %24 = vector.broadcast %cst_17 : f32 to vector<16x1024xf32>
      %25 = arith.maximumf %23, %24 : vector<16x1024xf32>
      %c2_i32_18 = arith.constant 2 : i32
      %26 = arith.muli %c2_i32_18, %arg9 : i32
      %c1_i32_19 = arith.constant 1 : i32
      %27 = arith.addi %26, %c1_i32_19 : i32
      %28 = arith.index_cast %27 : i32 to index
      %c0_20 = arith.constant 0 : index
      %c0_21 = arith.constant 0 : index
      %29 = vector.load %arg1[%28, %c0_20, %c0_21] : memref<28x16x96xbf16, #tpu.memory_space<vmem>>, vector<1x16x96xbf16>
      %30 = vector.shape_cast %29 : vector<1x16x96xbf16> to vector<16x96xbf16>
      %c0_22 = arith.constant 0 : index
      %c0_23 = arith.constant 0 : index
      %31 = vector.load %arg2[%c0_22, %c0_23] : memref<96x1024xbf16, #tpu.memory_space<vmem>>, vector<96x1024xbf16>
      %cst_24 = arith.constant dense<0.000000e+00> : vector<16x1024xf32>
      %32 = tpu.matmul %30, %31, %cst_24 {dimension_numbers = #tpu.dot_dimension_numbers<[1], [0], [0], [1], [0, 0, 1, 1], [], []>} : vector<16x96xbf16>, vector<96x1024xbf16>, vector<16x1024xf32> -> vector<16x1024xf32>
      %c0_25 = arith.constant 0 : index
      %c0_26 = arith.constant 0 : index
      %33 = vector.load %arg3[%c0_25, %c0_26] : memref<1x1024xf32, #tpu.memory_space<vmem>>, vector<1x1024xf32>
      %34 = vector.broadcast %33 : vector<1x1024xf32> to vector<16x1024xf32>
      %35 = arith.addf %32, %34 : vector<16x1024xf32>
      %cst_27 = arith.constant 0.000000e+00 : f32
      %36 = vector.broadcast %cst_27 : f32 to vector<16x1024xf32>
      %37 = arith.maximumf %35, %36 : vector<16x1024xf32>
      %38 = arith.maximumf %25, %37 : vector<16x1024xf32>
      %39 = vector.extract_strided_slice %38 {offsets = [0, 0], sizes = [16, 512], strides = [1, 1]} : vector<16x1024xf32> to vector<16x512xf32>
      %40 = vector.extract_strided_slice %38 {offsets = [0, 512], sizes = [16, 512], strides = [1, 1]} : vector<16x1024xf32> to vector<16x512xf32>
      %41 = arith.maximumf %39, %40 : vector<16x512xf32>
      %42 = arith.truncf %41 : vector<16x512xf32> to vector<16x512xbf16>
      %43 = arith.index_cast %arg9 : i32 to index
      %c0_28 = arith.constant 0 : index
      %c0_29 = arith.constant 0 : index
      %44 = vector.load %arg4[%43, %c0_28, %c0_29] : memref<14x512x128xbf16, #tpu.memory_space<vmem>>, vector<1x512x128xbf16>
      %45 = vector.shape_cast %44 : vector<1x512x128xbf16> to vector<512x128xbf16>
      %cst_30 = arith.constant dense<0.000000e+00> : vector<16x128xf32>
      %46 = tpu.matmul %42, %45, %cst_30 {dimension_numbers = #tpu.dot_dimension_numbers<[1], [0], [0], [1], [0, 0, 1, 1], [], []>} : vector<16x512xbf16>, vector<512x128xbf16>, vector<16x128xf32> -> vector<16x128xf32>
      %47 = arith.addf %arg10, %46 : vector<16x128xf32>
      scf.yield %47 : vector<16x128xf32>
    }
    %c14_i32_0 = arith.constant 14 : i32
    %c0 = arith.constant 0 : index
    %c0_1 = arith.constant 0 : index
    %3 = vector.load %arg5[%c0, %c0_1] : memref<1x128xf32, #tpu.memory_space<vmem>>, vector<1x128xf32>
    %4 = vector.broadcast %3 : vector<1x128xf32> to vector<16x128xf32>
    %5 = arith.addf %2, %4 : vector<16x128xf32>
    %cst_2 = arith.constant 0.000000e+00 : f32
    %6 = vector.broadcast %cst_2 : f32 to vector<16x128xf32>
    %7 = arith.maximumf %5, %6 : vector<16x128xf32>
    %8 = arith.truncf %7 : vector<16x128xf32> to vector<16x128xbf16>
    %c0_3 = arith.constant 0 : index
    %c0_4 = arith.constant 0 : index
    %9 = vector.load %arg6[%c0_3, %c0_4] : memref<128x128xbf16, #tpu.memory_space<vmem>>, vector<128x128xbf16>
    %cst_5 = arith.constant dense<0.000000e+00> : vector<16x128xf32>
    %10 = tpu.matmul %8, %9, %cst_5 {dimension_numbers = #tpu.dot_dimension_numbers<[1], [0], [0], [1], [0, 0, 1, 1], [], []>} : vector<16x128xbf16>, vector<128x128xbf16>, vector<16x128xf32> -> vector<16x128xf32>
    %c0_6 = arith.constant 0 : index
    %c0_7 = arith.constant 0 : index
    %11 = vector.load %arg7[%c0_6, %c0_7] : memref<1x128xf32, #tpu.memory_space<vmem>>, vector<1x128xf32>
    %12 = vector.broadcast %11 : vector<1x128xf32> to vector<16x128xf32>
    %13 = arith.addf %10, %12 : vector<16x128xf32>
    %c0_8 = arith.constant 0 : index
    %c0_9 = arith.constant 0 : index
    %14 = vector.load %arg8[%c0_8, %c0_9] : memref<16x128xf32, #tpu.memory_space<vmem>>, vector<16x128xf32>
    tpu.vector_store %arg8[%c0_8, %c0_9], %13 {strides = array<i32>} : memref<16x128xf32, #tpu.memory_space<vmem>>, vector<16x128xf32>,
    return
  }
  func.func @transform_0(%arg0: i32) -> (i32, i32, i32) {
    %c0_i32 = arith.constant 0 : i32
    %c0_i32_0 = arith.constant 0 : i32
    %c0_i32_1 = arith.constant 0 : i32
    return %c0_i32, %arg0, %c0_i32_0 : i32, i32, i32
  }
  func.func @transform_1(%arg0: i32) -> (i32, i32) {
    %c0_i32 = arith.constant 0 : i32
    %c0_i32_0 = arith.constant 0 : i32
    %c0_i32_1 = arith.constant 0 : i32
    return %c0_i32, %c0_i32_0 : i32, i32
  }
  func.func @transform_2(%arg0: i32) -> (i32, i32) {
    %c0_i32 = arith.constant 0 : i32
    %c0_i32_0 = arith.constant 0 : i32
    %c0_i32_1 = arith.constant 0 : i32
    return %c0_i32, %c0_i32_0 : i32, i32
  }
  func.func @transform_3(%arg0: i32) -> (i32, i32, i32) {
    %c0_i32 = arith.constant 0 : i32
    %c0_i32_0 = arith.constant 0 : i32
    %c0_i32_1 = arith.constant 0 : i32
    %c0_i32_2 = arith.constant 0 : i32
    return %c0_i32, %c0_i32_0, %c0_i32_1 : i32, i32, i32
  }
  func.func @transform_4(%arg0: i32) -> (i32, i32) {
    %c0_i32 = arith.constant 0 : i32
    %c0_i32_0 = arith.constant 0 : i32
    %c0_i32_1 = arith.constant 0 : i32
    return %c0_i32, %c0_i32_0 : i32, i32
  }
  func.func @transform_5(%arg0: i32) -> (i32, i32) {
    %c0_i32 = arith.constant 0 : i32
    %c0_i32_0 = arith.constant 0 : i32
    %c0_i32_1 = arith.constant 0 : i32
    return %c0_i32, %c0_i32_0 : i32, i32
  }
  func.func @transform_6(%arg0: i32) -> (i32, i32) {
    %c0_i32 = arith.constant 0 : i32
    %c0_i32_0 = arith.constant 0 : i32
    %c0_i32_1 = arith.constant 0 : i32
    return %c0_i32, %c0_i32_0 : i32, i32
  }
  func.func @transform_7(%arg0: i32) -> (i32, i32) {
    %c0_i32 = arith.constant 0 : i32
    %c0_i32_0 = arith.constant 0 : i32
    return %arg0, %c0_i32 : i32, i32
  }
}

</mosaic_0001>

<llo_original>
// kernel: tpu_custom_call.1
$region0: #{tpu_custom_call.1}
  #allocation0 [shape = 'u32[]', space=smem, size = 0x4, offset = 0x4, fixed_abs, tag = 'smem constant byte address 0x4 - core index']
  #allocation1 [shape = 'u32[144,128]{1,0:T(1,128)}', space=vmem, size = 0x12000, scoped, tag = 'internal scratch']
  %s0 = inlined_call_operand.hbm [shape: bf16[28,16,96], index: 0, kind: input, shape index: {}]
  %s1 = inlined_call_operand.hbm [shape: bf16[96,1024], index: 1, kind: input, shape index: {}]
  %s2 = inlined_call_operand.hbm [shape: f32[1,1024], index: 2, kind: input, shape index: {}]
  %s3 = inlined_call_operand.hbm [shape: bf16[14,512,128], index: 3, kind: input, shape index: {}]
  %s4 = inlined_call_operand.hbm [shape: f32[1,128], index: 4, kind: input, shape index: {}]
  %s5 = inlined_call_operand.hbm [shape: bf16[128,128], index: 5, kind: input, shape index: {}]
  %s6 = inlined_call_operand.hbm [shape: f32[1,128], index: 6, kind: input, shape index: {}]
  %s7 = inlined_call_operand.hbm [shape: f32[16,128], index: 7, kind: output, shape index: {}]
  %s8 = sld [smem:[#allocation0]]
  $region73: #{tpu_custom_call.1} parent=0
    _
  %s10 = ssub.s32 1, %s8
  %s11 = scalar_select 0, %s10, %s8
  $region1: #{tpu_custom_call.1} parent=0
    #allocation2 [shape = 'u8[114688]{0}', space=vmem, size = 0x1c000, scoped, tag = 'input window, operand 0, single buffered']
    #allocation3 [shape = 's32[1]{0}', space=sflag, size = 0x4, scoped, tag = 'scoped memory for tpu_custom_call.1']
    #allocation4 [shape = 's32[1]{0}', space=sflag, size = 0x4, scoped, tag = 'scoped memory for tpu_custom_call.1']
    #allocation5 [shape = 'u8[196608]{0}', space=vmem, size = 0x30000, scoped, tag = 'input window, operand 1, single buffered']
    #allocation6 [shape = 's32[1]{0}', space=sflag, size = 0x4, scoped, tag = 'scoped memory for tpu_custom_call.1']
    #allocation7 [shape = 'u8[4096]{0}', space=vmem, size = 0x1000, scoped, tag = 'input window, operand 2, single buffered']
    #allocation8 [shape = 'u8[1835008]{0}', space=vmem, size = 0x1c0000, scoped, tag = 'input window, operand 3, single buffered']
    #allocation9 [shape = 's32[1]{0}', space=sflag, size = 0x4, scoped, tag = 'scoped memory for tpu_custom_call.1']
    #allocation10 [shape = 'u8[512]{0}', space=vmem, size = 0x400, scoped, tag = 'input window, operand 4, single buffered']
    #allocation11 [shape = 'u8[32768]{0}', space=vmem, size = 0x8000, scoped, tag = 'input window, operand 5, single buffered']
    #allocation12 [shape = 's32[1]{0}', space=sflag, size = 0x4, scoped, tag = 'scoped memory for tpu_custom_call.1']
    #allocation13 [shape = 'u8[512]{0}', space=vmem, size = 0x400, scoped, tag = 'input window, operand 6, single buffered']
    #allocation14 [shape = 'u8[8192]{0}', space=vmem, size = 0x2000, scoped, tag = 'output window, operand 0, single buffered']
    %12 = vsyncpa [#allocation3], 0
    %13 = vsyncpa [#allocation6], 0
    %14 = vsyncpa [#allocation9], 0
    %15 = vsyncpa [#allocation12], 0
    %16 = vsyncpa [#allocation4], 0
    // Predicated region
    $region2: #{tpu_custom_call.1} parent=1 // pred_check
      _
    $region3: #{tpu_custom_call.1} parent=1 // pred_check_branch
      %18 = sbr.rel (0) target = $region5
    $region4: #{tpu_custom_call.1} parent=1 // pred_region
      %s20 = ssub.s32 3584, 3584
      %21 = vsyncadd [#allocation3], %s20
      %s22 = sshll.u32 [#allocation2], 4
      %s23 = int_to_ptr.vmem [resolvable:$true] %s22
      %28 = dma.hbm_to_vmem [thread:$0]  %s0, 3584, %s23, [#allocation3], 64, 64, 4
    $region5: #{tpu_custom_call.1} parent=1 // pred_fallthru
      _
    // Predicated region
    $region6: #{tpu_custom_call.1} parent=1 // pred_check
      _
    $region7: #{tpu_custom_call.1} parent=1 // pred_check_branch
      %30 = sbr.rel (0) target = $region9
    $region8: #{tpu_custom_call.1} parent=1 // pred_region
      %s32 = ssub.s32 6144, 6144
      %33 = vsyncadd [#allocation6], %s32
      %s34 = sshll.u32 [#allocation5], 4
      %s35 = int_to_ptr.vmem [resolvable:$true] %s34
      %40 = dma.hbm_to_vmem [thread:$0]  %s1, 6144, %s35, [#allocation6], 512, 512, 32
    $region9: #{tpu_custom_call.1} parent=1 // pred_fallthru
      _
    // Predicated region
    $region10: #{tpu_custom_call.1} parent=1 // pred_check
      _
    $region11: #{tpu_custom_call.1} parent=1 // pred_check_branch
      %42 = sbr.rel (0) target = $region13
    $region12: #{tpu_custom_call.1} parent=1 // pred_region
      %s44 = ssub.s32 128, 128
      %45 = vsyncadd [#allocation6], %s44
      %s47 = sshll.u32 [#allocation7], 4
      %s48 = int_to_ptr.vmem [resolvable:$true] %s47
      %50 = dma.hbm_to_vmem [thread:$0]  %s2, 128, %s48, [#allocation6]
    $region13: #{tpu_custom_call.1} parent=1 // pred_fallthru
      _
    // Predicated region
    $region14: #{tpu_custom_call.1} parent=1 // pred_check
      _
    $region15: #{tpu_custom_call.1} parent=1 // pred_check_branch
      %52 = sbr.rel (0) target = $region17
    $region16: #{tpu_custom_call.1} parent=1 // pred_region
      %s54 = ssub.s32 57344, 57344
      %55 = vsyncadd [#allocation9], %s54
      %s56 = sshll.u32 [#allocation8], 4
      %s57 = int_to_ptr.vmem [resolvable:$true] %s56
      %62 = dma.hbm_to_vmem [thread:$0]  %s3, 57344, %s57, [#allocation9], 64, 64, 4
    $region17: #{tpu_custom_call.1} parent=1 // pred_fallthru
      _
    // Predicated region
    $region18: #{tpu_custom_call.1} parent=1 // pred_check
      _
    $region19: #{tpu_custom_call.1} parent=1 // pred_check_branch
      %64 = sbr.rel (0) target = $region21
    $region20: #{tpu_custom_call.1} parent=1 // pred_region
      %s66 = ssub.s32 16, 16
      %67 = vsyncadd [#allocation9], %s66
      %s69 = sshll.u32 [#allocation10], 4
      %s70 = int_to_ptr.vmem [resolvable:$true] %s69
      %72 = dma.hbm_to_vmem [thread:$0]  %s4, 16, %s70, [#allocation9]
    $region21: #{tpu_custom_call.1} parent=1 // pred_fallthru
      _
    // Predicated region
    $region22: #{tpu_custom_call.1} parent=1 // pred_check
      _
    $region23: #{tpu_custom_call.1} parent=1 // pred_check_branch
      %74 = sbr.rel (0) target = $region25
    $region24: #{tpu_custom_call.1} parent=1 // pred_region
      %s76 = ssub.s32 1024, 1024
      %77 = vsyncadd [#allocation12], %s76
      %s78 = sshll.u32 [#allocation11], 4
      %s79 = int_to_ptr.vmem [resolvable:$true] %s78
      %84 = dma.hbm_to_vmem [thread:$0]  %s5, 1024, %s79, [#allocation12], 64, 64, 4
    $region25: #{tpu_custom_call.1} parent=1 // pred_fallthru
      _
    // Predicated region
    $region26: #{tpu_custom_call.1} parent=1 // pred_check
      _
    $region27: #{tpu_custom_call.1} parent=1 // pred_check_branch
      %86 = sbr.rel (0) target = $region29
    $region28: #{tpu_custom_call.1} parent=1 // pred_region
      %s88 = ssub.s32 16, 16
      %89 = vsyncadd [#allocation12], %s88
      %s91 = sshll.u32 [#allocation13], 4
      %s92 = int_to_ptr.vmem [resolvable:$true] %s91
      %94 = dma.hbm_to_vmem [thread:$0]  %s6, 16, %s92, [#allocation12]
    $region29: #{tpu_custom_call.1} parent=1 // pred_fallthru
      _
    // Predicated region
    $region30: #{tpu_custom_call.1} parent=1 // pred_check
      _
    $region31: #{tpu_custom_call.1} parent=1 // pred_check_branch
      %96 = sbr.rel (0) target = $region33
    $region32: #{tpu_custom_call.1} parent=1 // pred_region
      %97 = dma.done [#allocation3], 3584
    $region33: #{tpu_custom_call.1} parent=1 // pred_fallthru
      _
    // Predicated region
    $region34: #{tpu_custom_call.1} parent=1 // pred_check
      _
    $region35: #{tpu_custom_call.1} parent=1 // pred_check_branch
      %99 = sbr.rel (0) target = $region37
    $region36: #{tpu_custom_call.1} parent=1 // pred_region
      %100 = dma.done [#allocation6], 6144
    $region37: #{tpu_custom_call.1} parent=1 // pred_fallthru
      _
    // Predicated region
    $region38: #{tpu_custom_call.1} parent=1 // pred_check
      _
    $region39: #{tpu_custom_call.1} parent=1 // pred_check_branch
      %102 = sbr.rel (0) target = $region41
    $region40: #{tpu_custom_call.1} parent=1 // pred_region
      %103 = dma.done [#allocation6], 128
    $region41: #{tpu_custom_call.1} parent=1 // pred_fallthru
      _
    // Predicated region
    $region42: #{tpu_custom_call.1} parent=1 // pred_check
      _
    $region43: #{tpu_custom_call.1} parent=1 // pred_check_branch
      %105 = sbr.rel (0) target = $region45
    $region44: #{tpu_custom_call.1} parent=1 // pred_region
      %106 = dma.done [#allocation9], 57344
    $region45: #{tpu_custom_call.1} parent=1 // pred_fallthru
      _
    // Predicated region
    $region46: #{tpu_custom_call.1} parent=1 // pred_check
      _
    $region47: #{tpu_custom_call.1} parent=1 // pred_check_branch
      %108 = sbr.rel (0) target = $region49
    $region48: #{tpu_custom_call.1} parent=1 // pred_region
      %109 = dma.done [#allocation9], 16
    $region49: #{tpu_custom_call.1} parent=1 // pred_fallthru
      _
    // Predicated region
    $region50: #{tpu_custom_call.1} parent=1 // pred_check
      _
    $region51: #{tpu_custom_call.1} parent=1 // pred_check_branch
      %111 = sbr.rel (0) target = $region53
    $region52: #{tpu_custom_call.1} parent=1 // pred_region
      %112 = dma.done [#allocation12], 1024
    $region53: #{tpu_custom_call.1} parent=1 // pred_fallthru
      _
    // Predicated region
    $region54: #{tpu_custom_call.1} parent=1 // pred_check
      _
    $region55: #{tpu_custom_call.1} parent=1 // pred_check_branch
      %114 = sbr.rel (0) target = $region57
    $region56: #{tpu_custom_call.1} parent=1 // pred_region
      %115 = dma.done [#allocation12], 16
    $region57: #{tpu_custom_call.1} parent=1 // pred_fallthru
      _
    loop: start=0, step=1, limit=14
    $region58: #{tpu_custom_call.1} parent=1 // loop_pre_header
      _
    $region59: #{tpu_custom_call.1} parent=1 // loop_header
      %s118 = sphi 0, %s122
      %p119 = scmp.ge.s32.totalorder %s118, 14
      %v123 = vphi 0.0, %v1229
      %v124 = vphi 0.0, %v1230
    $region60: #{tpu_custom_call.1} parent=1 // loop_header_branch
      %121 = sbr.rel (%p119) target = $region64
    $region61: #{tpu_custom_call.1} parent=1 // loop_body
      %s125 = smul.u32 %s118, 2
      %s126 = smul.u32 %s125, 2
      %s127 = smul.addr %s126, 4
      %s128 = scalar_lea.vmem [#allocation2], %s127
      %v129 = vld [vmem:[%s128] sm:$0xf]
      %v130 = vld [vmem:[%s128 + $0x4] sm:$0xf]
      %v131 = vld [vmem:[#allocation5] sm:$0xff]
      %v132 = vld [vmem:[#allocation5 + $0x8] sm:$0xff]
      %v133 = vld [vmem:[#allocation5 + $0x10] sm:$0xff]
      %v134 = vld [vmem:[#allocation5 + $0x18] sm:$0xff]
      %v135 = vld [vmem:[#allocation5 + $0x20] sm:$0xff]
      %v136 = vld [vmem:[#allocation5 + $0x28] sm:$0xff]
      %v137 = vld [vmem:[#allocation5 + $0x30] sm:$0xff]
      %v138 = vld [vmem:[#allocation5 + $0x38] sm:$0xff]
      %v139 = vld [vmem:[#allocation5 + $0x40] sm:$0xff]
      %v140 = vld [vmem:[#allocation5 + $0x48] sm:$0xff]
      %v141 = vld [vmem:[#allocation5 + $0x50] sm:$0xff]
      %v142 = vld [vmem:[#allocation5 + $0x58] sm:$0xff]
      %v143 = vld [vmem:[#allocation5 + $0x60] sm:$0xff]
      %v144 = vld [vmem:[#allocation5 + $0x68] sm:$0xff]
      %v145 = vld [vmem:[#allocation5 + $0x70] sm:$0xff]
      %v146 = vld [vmem:[#allocation5 + $0x78] sm:$0xff]
      %v147 = vld [vmem:[#allocation5 + $0x80] sm:$0xff]
      %v148 = vld [vmem:[#allocation5 + $0x88] sm:$0xff]
      %v149 = vld [vmem:[#allocation5 + $0x90] sm:$0xff]
      %v150 = vld [vmem:[#allocation5 + $0x98] sm:$0xff]
      %v151 = vld [vmem:[#allocation5 + $0xa0] sm:$0xff]
      %v152 = vld [vmem:[#allocation5 + $0xa8] sm:$0xff]
      %v153 = vld [vmem:[#allocation5 + $0xb0] sm:$0xff]
      %v154 = vld [vmem:[#allocation5 + $0xb8] sm:$0xff]
      %v155 = vld [vmem:[#allocation5 + $0xc0] sm:$0xff]
      %v156 = vld [vmem:[#allocation5 + $0xc8] sm:$0xff]
      %v157 = vld [vmem:[#allocation5 + $0xd0] sm:$0xff]
      %v158 = vld [vmem:[#allocation5 + $0xd8] sm:$0xff]
      %v159 = vld [vmem:[#allocation5 + $0xe0] sm:$0xff]
      %v160 = vld [vmem:[#allocation5 + $0xe8] sm:$0xff]
      %v161 = vld [vmem:[#allocation5 + $0xf0] sm:$0xff]
      %v162 = vld [vmem:[#allocation5 + $0xf8] sm:$0xff]
      %v163 = vld [vmem:[#allocation5 + $0x100] sm:$0xff]
      %v164 = vld [vmem:[#allocation5 + $0x108] sm:$0xff]
      %v165 = vld [vmem:[#allocation5 + $0x110] sm:$0xff]
      %v166 = vld [vmem:[#allocation5 + $0x118] sm:$0xff]
      %v167 = vld [vmem:[#allocation5 + $0x120] sm:$0xff]
      %v168 = vld [vmem:[#allocation5 + $0x128] sm:$0xff]
      %v169 = vld [vmem:[#allocation5 + $0x130] sm:$0xff]
      %v170 = vld [vmem:[#allocation5 + $0x138] sm:$0xff]
      %v171 = vld [vmem:[#allocation5 + $0x140] sm:$0xff]
      %v172 = vld [vmem:[#allocation5 + $0x148] sm:$0xff]
      %v173 = vld [vmem:[#allocation5 + $0x150] sm:$0xff]
      %v174 = vld [vmem:[#allocation5 + $0x158] sm:$0xff]
      %v175 = vld [vmem:[#allocation5 + $0x160] sm:$0xff]
      %v176 = vld [vmem:[#allocation5 + $0x168] sm:$0xff]
      %v177 = vld [vmem:[#allocation5 + $0x170] sm:$0xff]
      %v178 = vld [vmem:[#allocation5 + $0x178] sm:$0xff]
      %v179 = vld [vmem:[#allocation7] sm:$0xff]
      %v181 = vlaneseq
      %v182 = vshrl.u32 %v181, 7
      %v183 = vsub.s32 0, %v182
      %v184 = vrot.slane %v179, %v183
      %v185 = vlaneseq
      %v186 = vshrl.u32 %v185, 7
      %v187 = vsub.s32 1, %v186
      %v188 = vrot.slane %v179, %v187
      %v189 = vlaneseq
      %v190 = vshrl.u32 %v189, 7
      %v191 = vsub.s32 2, %v190
      %v192 = vrot.slane %v179, %v191
      %v193 = vlaneseq
      %v194 = vshrl.u32 %v193, 7
      %v195 = vsub.s32 3, %v194
      %v196 = vrot.slane %v179, %v195
      %v197 = vlaneseq
      %v198 = vshrl.u32 %v197, 7
      %v199 = vsub.s32 4, %v198
      %v200 = vrot.slane %v179, %v199
      %v201 = vlaneseq
      %v202 = vshrl.u32 %v201, 7
      %v203 = vsub.s32 5, %v202
      %v204 = vrot.slane %v179, %v203
      %v205 = vlaneseq
      %v206 = vshrl.u32 %v205, 7
      %v207 = vsub.s32 6, %v206
      %v208 = vrot.slane %v179, %v207
      %v209 = vlaneseq
      %v210 = vshrl.u32 %v209, 7
      %v211 = vsub.s32 7, %v210
      %v212 = vrot.slane %v179, %v211
      %v223 = vunpack.c.l.b16 %v129
      %v224 = vunpack.c.l.b16 %v130
      %v225 = vpack.c.b16 %v224, %v223
      %v274 = vunpack.c.l.b16 %v131
      %v275 = vunpack.c.h.b16 %v131
      %v276 = vunpack.c.l.b16 %v132
      %v277 = vunpack.c.h.b16 %v132
      %v278 = vunpack.c.l.b16 %v133
      %v279 = vunpack.c.h.b16 %v133
      %v280 = vunpack.c.l.b16 %v134
      %v281 = vunpack.c.h.b16 %v134
      %v282 = vunpack.c.l.b16 %v135
      %v283 = vunpack.c.h.b16 %v135
      %v284 = vunpack.c.l.b16 %v136
      %v285 = vunpack.c.h.b16 %v136
      %v286 = vunpack.c.l.b16 %v137
      %v287 = vunpack.c.h.b16 %v137
      %v288 = vunpack.c.l.b16 %v138
      %v289 = vunpack.c.h.b16 %v138
      %v290 = vunpack.c.l.b16 %v139
      %v291 = vunpack.c.h.b16 %v139
      %v292 = vunpack.c.l.b16 %v140
      %v293 = vunpack.c.h.b16 %v140
      %v294 = vunpack.c.l.b16 %v141
      %v295 = vunpack.c.h.b16 %v141
      %v296 = vunpack.c.l.b16 %v142
      %v297 = vunpack.c.h.b16 %v142
      %v298 = vunpack.c.l.b16 %v143
      %v299 = vunpack.c.h.b16 %v143
      %v300 = vunpack.c.l.b16 %v144
      %v301 = vunpack.c.h.b16 %v144
      %v302 = vunpack.c.l.b16 %v145
      %v303 = vunpack.c.h.b16 %v145
      %v304 = vunpack.c.l.b16 %v146
      %v305 = vunpack.c.h.b16 %v146
      %v306 = vunpack.c.l.b16 %v147
      %v307 = vunpack.c.h.b16 %v147
      %v308 = vunpack.c.l.b16 %v148
      %v309 = vunpack.c.h.b16 %v148
      %v310 = vunpack.c.l.b16 %v149
      %v311 = vunpack.c.h.b16 %v149
      %v312 = vunpack.c.l.b16 %v150
      %v313 = vunpack.c.h.b16 %v150
      %v314 = vunpack.c.l.b16 %v151
      %v315 = vunpack.c.h.b16 %v151
      %v316 = vunpack.c.l.b16 %v152
      %v317 = vunpack.c.h.b16 %v152
      %v318 = vunpack.c.l.b16 %v153
      %v319 = vunpack.c.h.b16 %v153
      %v320 = vunpack.c.l.b16 %v154
      %v321 = vunpack.c.h.b16 %v154
      %v322 = vunpack.c.l.b16 %v155
      %v323 = vunpack.c.h.b16 %v155
      %v324 = vunpack.c.l.b16 %v156
      %v325 = vunpack.c.h.b16 %v156
      %v326 = vunpack.c.l.b16 %v157
      %v327 = vunpack.c.h.b16 %v157
      %v328 = vunpack.c.l.b16 %v158
      %v329 = vunpack.c.h.b16 %v158
      %v330 = vunpack.c.l.b16 %v159
      %v331 = vunpack.c.h.b16 %v159
      %v332 = vunpack.c.l.b16 %v160
      %v333 = vunpack.c.h.b16 %v160
      %v334 = vunpack.c.l.b16 %v161
      %v335 = vunpack.c.h.b16 %v161
      %v336 = vunpack.c.l.b16 %v162
      %v337 = vunpack.c.h.b16 %v162
      %v338 = vunpack.c.l.b16 %v163
      %v339 = vunpack.c.h.b16 %v163
      %v340 = vunpack.c.l.b16 %v164
      %v341 = vunpack.c.h.b16 %v164
      %v342 = vunpack.c.l.b16 %v165
      %v343 = vunpack.c.h.b16 %v165
      %v344 = vunpack.c.l.b16 %v166
      %v345 = vunpack.c.h.b16 %v166
      %v346 = vunpack.c.l.b16 %v167
      %v347 = vunpack.c.h.b16 %v167
      %v348 = vunpack.c.l.b16 %v168
      %v349 = vunpack.c.h.b16 %v168
      %v350 = vunpack.c.l.b16 %v169
      %v351 = vunpack.c.h.b16 %v169
      %v352 = vunpack.c.l.b16 %v170
      %v353 = vunpack.c.h.b16 %v170
      %v354 = vunpack.c.l.b16 %v171
      %v355 = vunpack.c.h.b16 %v171
      %v356 = vunpack.c.l.b16 %v172
      %v357 = vunpack.c.h.b16 %v172
      %v358 = vunpack.c.l.b16 %v173
      %v359 = vunpack.c.h.b16 %v173
      %v360 = vunpack.c.l.b16 %v174
      %v361 = vunpack.c.h.b16 %v174
      %v362 = vunpack.c.l.b16 %v175
      %v363 = vunpack.c.h.b16 %v175
      %v364 = vunpack.c.l.b16 %v176
      %v365 = vunpack.c.h.b16 %v176
      %v366 = vunpack.c.l.b16 %v177
      %v367 = vunpack.c.h.b16 %v177
      %v368 = vunpack.c.l.b16 %v178
      %v369 = vunpack.c.h.b16 %v178
      %v370 = vpack.c.b16 %v282, %v274
      %v371 = vpack.c.b16 %v283, %v275
      %v372 = vpack.c.b16 %v284, %v276
      %v373 = vpack.c.b16 %v285, %v277
      %v374 = vpack.c.b16 %v286, %v278
      %v375 = vpack.c.b16 %v287, %v279
      %v376 = vpack.c.b16 %v288, %v280
      %v377 = vpack.c.b16 %v289, %v281
      %v378 = vpack.c.b16 %v298, %v290
      %v379 = vpack.c.b16 %v299, %v291
      %v380 = vpack.c.b16 %v300, %v292
      %v381 = vpack.c.b16 %v301, %v293
      %v382 = vpack.c.b16 %v302, %v294
      %v383 = vpack.c.b16 %v303, %v295
      %v384 = vpack.c.b16 %v304, %v296
      %v385 = vpack.c.b16 %v305, %v297
      %v386 = vpack.c.b16 %v314, %v306
      %v387 = vpack.c.b16 %v315, %v307
      %v388 = vpack.c.b16 %v316, %v308
      %v389 = vpack.c.b16 %v317, %v309
      %v390 = vpack.c.b16 %v318, %v310
      %v391 = vpack.c.b16 %v319, %v311
      %v392 = vpack.c.b16 %v320, %v312
      %v393 = vpack.c.b16 %v321, %v313
      %v394 = vpack.c.b16 %v330, %v322
      %v395 = vpack.c.b16 %v331, %v323
      %v396 = vpack.c.b16 %v332, %v324
      %v397 = vpack.c.b16 %v333, %v325
      %v398 = vpack.c.b16 %v334, %v326
      %v399 = vpack.c.b16 %v335, %v327
      %v400 = vpack.c.b16 %v336, %v328
      %v401 = vpack.c.b16 %v337, %v329
      %v402 = vpack.c.b16 %v346, %v338
      %v403 = vpack.c.b16 %v347, %v339
      %v404 = vpack.c.b16 %v348, %v340
      %v405 = vpack.c.b16 %v349, %v341
      %v406 = vpack.c.b16 %v350, %v342
      %v407 = vpack.c.b16 %v351, %v343
      %v408 = vpack.c.b16 %v352, %v344
      %v409 = vpack.c.b16 %v353, %v345
      %v410 = vpack.c.b16 %v362, %v354
      %v411 = vpack.c.b16 %v363, %v355
      %v412 = vpack.c.b16 %v364, %v356
      %v413 = vpack.c.b16 %v365, %v357
      %v414 = vpack.c.b16 %v366, %v358
      %v415 = vpack.c.b16 %v367, %v359
      %v416 = vpack.c.b16 %v368, %v360
      %v417 = vpack.c.b16 %v369, %v361
      %vm466 = vcmask 785408
      %v468 = vsel %vm466, %v225, 0
      %470 = vmatprep.subr.bf16.mxu0 %v371
      %471 = vmatpush1.bf16.msra.mxu0 %v370
      %472 = vmatprep.subr.bf16.mxu0 %v379
      %473 = vmatpush1.bf16.msra.mxu0 %v378
      %474 = vmatprep.subr.bf16.mxu0 %v387
      %475 = vmatpush1.bf16.msra.mxu0 %v386
      %476 = vmatprep.subr.bf16.mxu0 %v395
      %477 = vmatpush1.bf16.msra.mxu0 %v394
      %478 = vmatprep.subr.bf16.mxu0 %v403
      %479 = vmatpush1.bf16.msra.mxu0 %v402
      %480 = vmatprep.subr.bf16.mxu0 %v411
      %481 = vmatpush1.bf16.msra.mxu0 %v410
      %482 = vmatprep.subr.bf16.mxu0 0
      %483 = vmatpush1.bf16.msra.mxu0 0
      %484 = vmatprep.subr.bf16.mxu0 0
      %485 = vmatpush1.bf16.msra.mxu0 0
      %486 = vmatprep.subr.bf16.mxu0 0
      %487 = vmatpush1.bf16.msra.mxu0 0
      %488 = vmatprep.subr.bf16.mxu0 0
      %489 = vmatpush1.bf16.msra.mxu0 0
      %490 = vmatprep.subr.bf16.mxu0 0
      %491 = vmatpush1.bf16.msra.mxu0 0
      %492 = vmatprep.subr.bf16.mxu0 0
      %493 = vmatpush1.bf16.msra.mxu0 0
      %494 = vmatprep.subr.bf16.mxu0 0
      %495 = vmatpush1.bf16.msra.mxu0 0
      %496 = vmatprep.subr.bf16.mxu0 0
      %497 = vmatpush1.bf16.msra.mxu0 0
      %498 = vmatprep.subr.bf16.mxu0 0
      %499 = vmatpush1.bf16.msra.mxu0 0
      %500 = vmatprep.subr.bf16.mxu0 0
      %501 = vmatpush1.bf16.msra.mxu0 0
      %502 = vmatprep.mubr.bf16.mxu0 0
      %503 = vmatmul.mubr.bf16.gmra.mrb[0].mxu0 %v468
      %v504 = vpop.f32.mrb[0].mxu0
      %v505 = vadd.f32 %v184, %v504
      %v506 = vpop.f32.mrb[0].mxu0
      %v507 = vadd.f32 %v188, %v506
      %v508 = vpop.f32.mrb[0].mxu0
      %v509 = vadd.f32 %v184, %v508
      %v510 = vpop.f32.mrb[0].mxu0
      %v511 = vadd.f32 %v188, %v510
      %512 = vdwg.mxu0
      %513 = vmatprep.subr.bf16.mxu0 %v373
      %514 = vmatpush1.bf16.msra.mxu0 %v372
      %515 = vmatprep.subr.bf16.mxu0 %v381
      %516 = vmatpush1.bf16.msra.mxu0 %v380
      %517 = vmatprep.subr.bf16.mxu0 %v389
      %518 = vmatpush1.bf16.msra.mxu0 %v388
      %519 = vmatprep.subr.bf16.mxu0 %v397
      %520 = vmatpush1.bf16.msra.mxu0 %v396
      %521 = vmatprep.subr.bf16.mxu0 %v405
      %522 = vmatpush1.bf16.msra.mxu0 %v404
      %523 = vmatprep.subr.bf16.mxu0 %v413
      %524 = vmatpush1.bf16.msra.mxu0 %v412
      %525 = vmatprep.subr.bf16.mxu0 0
      %526 = vmatpush1.bf16.msra.mxu0 0
      %527 = vmatprep.subr.bf16.mxu0 0
      %528 = vmatpush1.bf16.msra.mxu0 0
      %529 = vmatprep.subr.bf16.mxu0 0
      %530 = vmatpush1.bf16.msra.mxu0 0
      %531 = vmatprep.subr.bf16.mxu0 0
      %532 = vmatpush1.bf16.msra.mxu0 0
      %533 = vmatprep.subr.bf16.mxu0 0
      %534 = vmatpush1.bf16.msra.mxu0 0
      %535 = vmatprep.subr.bf16.mxu0 0
      %536 = vmatpush1.bf16.msra.mxu0 0
      %537 = vmatprep.subr.bf16.mxu0 0
      %538 = vmatpush1.bf16.msra.mxu0 0
      %539 = vmatprep.subr.bf16.mxu0 0
      %540 = vmatpush1.bf16.msra.mxu0 0
      %541 = vmatprep.subr.bf16.mxu0 0
      %542 = vmatpush1.bf16.msra.mxu0 0
      %543 = vmatprep.subr.bf16.mxu0 0
      %544 = vmatpush1.bf16.msra.mxu0 0
      %545 = vmatprep.mubr.bf16.mxu0 0
      %546 = vmatmul.mubr.bf16.gmra.mrb[0].mxu0 %v468
      %v547 = vpop.f32.mrb[0].mxu0
      %v548 = vadd.f32 %v192, %v547
      %v549 = vpop.f32.mrb[0].mxu0
      %v550 = vadd.f32 %v196, %v549
      %v551 = vpop.f32.mrb[0].mxu0
      %v552 = vadd.f32 %v192, %v551
      %v553 = vpop.f32.mrb[0].mxu0
      %v554 = vadd.f32 %v196, %v553
      %555 = vdwg.mxu0
      %556 = vmatprep.subr.bf16.mxu0 %v375
      %557 = vmatpush1.bf16.msra.mxu0 %v374
      %558 = vmatprep.subr.bf16.mxu0 %v383
      %559 = vmatpush1.bf16.msra.mxu0 %v382
      %560 = vmatprep.subr.bf16.mxu0 %v391
      %561 = vmatpush1.bf16.msra.mxu0 %v390
      %562 = vmatprep.subr.bf16.mxu0 %v399
      %563 = vmatpush1.bf16.msra.mxu0 %v398
      %564 = vmatprep.subr.bf16.mxu0 %v407
      %565 = vmatpush1.bf16.msra.mxu0 %v406
      %566 = vmatprep.subr.bf16.mxu0 %v415
      %567 = vmatpush1.bf16.msra.mxu0 %v414
      %568 = vmatprep.subr.bf16.mxu0 0
      %569 = vmatpush1.bf16.msra.mxu0 0
      %570 = vmatprep.subr.bf16.mxu0 0
      %571 = vmatpush1.bf16.msra.mxu0 0
      %572 = vmatprep.subr.bf16.mxu0 0
      %573 = vmatpush1.bf16.msra.mxu0 0
      %574 = vmatprep.subr.bf16.mxu0 0
      %575 = vmatpush1.bf16.msra.mxu0 0
      %576 = vmatprep.subr.bf16.mxu0 0
      %577 = vmatpush1.bf16.msra.mxu0 0
      %578 = vmatprep.subr.bf16.mxu0 0
      %579 = vmatpush1.bf16.msra.mxu0 0
      %580 = vmatprep.subr.bf16.mxu0 0
      %581 = vmatpush1.bf16.msra.mxu0 0
      %582 = vmatprep.subr.bf16.mxu0 0
      %583 = vmatpush1.bf16.msra.mxu0 0
      %584 = vmatprep.subr.bf16.mxu0 0
      %585 = vmatpush1.bf16.msra.mxu0 0
      %586 = vmatprep.subr.bf16.mxu0 0
      %587 = vmatpush1.bf16.msra.mxu0 0
      %588 = vmatprep.mubr.bf16.mxu0 0
      %589 = vmatmul.mubr.bf16.gmra.mrb[0].mxu0 %v468
      %v590 = vpop.f32.mrb[0].mxu0
      %v591 = vadd.f32 %v200, %v590
      %v592 = vpop.f32.mrb[0].mxu0
      %v593 = vadd.f32 %v204, %v592
      %v594 = vpop.f32.mrb[0].mxu0
      %v595 = vadd.f32 %v200, %v594
      %v596 = vpop.f32.mrb[0].mxu0
      %v597 = vadd.f32 %v204, %v596
      %598 = vdwg.mxu0
      %599 = vmatprep.subr.bf16.mxu0 %v377
      %600 = vmatpush1.bf16.msra.mxu0 %v376
      %601 = vmatprep.subr.bf16.mxu0 %v385
      %602 = vmatpush1.bf16.msra.mxu0 %v384
      %603 = vmatprep.subr.bf16.mxu0 %v393
      %604 = vmatpush1.bf16.msra.mxu0 %v392
      %605 = vmatprep.subr.bf16.mxu0 %v401
      %606 = vmatpush1.bf16.msra.mxu0 %v400
      %607 = vmatprep.subr.bf16.mxu0 %v409
      %608 = vmatpush1.bf16.msra.mxu0 %v408
      %609 = vmatprep.subr.bf16.mxu0 %v417
      %610 = vmatpush1.bf16.msra.mxu0 %v416
      %611 = vmatprep.subr.bf16.mxu0 0
      %612 = vmatpush1.bf16.msra.mxu0 0
      %613 = vmatprep.subr.bf16.mxu0 0
      %614 = vmatpush1.bf16.msra.mxu0 0
      %615 = vmatprep.subr.bf16.mxu0 0
      %616 = vmatpush1.bf16.msra.mxu0 0
      %617 = vmatprep.subr.bf16.mxu0 0
      %618 = vmatpush1.bf16.msra.mxu0 0
      %619 = vmatprep.subr.bf16.mxu0 0
      %620 = vmatpush1.bf16.msra.mxu0 0
      %621 = vmatprep.subr.bf16.mxu0 0
      %622 = vmatpush1.bf16.msra.mxu0 0
      %623 = vmatprep.subr.bf16.mxu0 0
      %624 = vmatpush1.bf16.msra.mxu0 0
      %625 = vmatprep.subr.bf16.mxu0 0
      %626 = vmatpush1.bf16.msra.mxu0 0
      %627 = vmatprep.subr.bf16.mxu0 0
      %628 = vmatpush1.bf16.msra.mxu0 0
      %629 = vmatprep.subr.bf16.mxu0 0
      %630 = vmatpush1.bf16.msra.mxu0 0
      %631 = vmatprep.mubr.bf16.mxu0 0
      %632 = vmatmul.mubr.bf16.gmra.mrb[0].mxu0 %v468
      %v633 = vpop.f32.mrb[0].mxu0
      %v634 = vadd.f32 %v208, %v633
      %v635 = vpop.f32.mrb[0].mxu0
      %v636 = vadd.f32 %v212, %v635
      %v637 = vpop.f32.mrb[0].mxu0
      %v638 = vadd.f32 %v208, %v637
      %v639 = vpop.f32.mrb[0].mxu0
      %v640 = vadd.f32 %v212, %v639
      %641 = vdwg.mxu0
      %v642 = vmax.f32 %v505, 0.0
      %v643 = vmax.f32 %v507, 0.0
      %v644 = vmax.f32 %v548, 0.0
      %v645 = vmax.f32 %v550, 0.0
      %v646 = vmax.f32 %v591, 0.0
      %v647 = vmax.f32 %v593, 0.0
      %v648 = vmax.f32 %v634, 0.0
      %v649 = vmax.f32 %v636, 0.0
      %v650 = vmax.f32 %v509, 0.0
      %v651 = vmax.f32 %v511, 0.0
      %v652 = vmax.f32 %v552, 0.0
      %v653 = vmax.f32 %v554, 0.0
      %v654 = vmax.f32 %v595, 0.0
      %v655 = vmax.f32 %v597, 0.0
      %v656 = vmax.f32 %v638, 0.0
      %v657 = vmax.f32 %v640, 0.0
      %s658 = sadd.s32 %s125, 1
      %s659 = smul.u32 %s658, 2
      %s660 = smul.addr %s659, 4
      %s661 = scalar_lea.vmem [#allocation2], %s660
      %v662 = vld [vmem:[%s661] sm:$0xf]
      %v663 = vld [vmem:[%s661 + $0x4] sm:$0xf]
      %v666 = vunpack.c.l.b16 %v662
      %v667 = vunpack.c.l.b16 %v663
      %v668 = vpack.c.b16 %v667, %v666
      %v670 = vsel %vm466, %v668, 0
      %672 = vmatprep.subr.bf16.mxu0 %v371
      %673 = vmatpush1.bf16.msra.mxu0 %v370
      %674 = vmatprep.subr.bf16.mxu0 %v379
      %675 = vmatpush1.bf16.msra.mxu0 %v378
      %676 = vmatprep.subr.bf16.mxu0 %v387
      %677 = vmatpush1.bf16.msra.mxu0 %v386
      %678 = vmatprep.subr.bf16.mxu0 %v395
      %679 = vmatpush1.bf16.msra.mxu0 %v394
      %680 = vmatprep.subr.bf16.mxu0 %v403
      %681 = vmatpush1.bf16.msra.mxu0 %v402
      %682 = vmatprep.subr.bf16.mxu0 %v411
      %683 = vmatpush1.bf16.msra.mxu0 %v410
      %684 = vmatprep.subr.bf16.mxu0 0
      %685 = vmatpush1.bf16.msra.mxu0 0
      %686 = vmatprep.subr.bf16.mxu0 0
      %687 = vmatpush1.bf16.msra.mxu0 0
      %688 = vmatprep.subr.bf16.mxu0 0
      %689 = vmatpush1.bf16.msra.mxu0 0
      %690 = vmatprep.subr.bf16.mxu0 0
      %691 = vmatpush1.bf16.msra.mxu0 0
      %692 = vmatprep.subr.bf16.mxu0 0
      %693 = vmatpush1.bf16.msra.mxu0 0
      %694 = vmatprep.subr.bf16.mxu0 0
      %695 = vmatpush1.bf16.msra.mxu0 0
      %696 = vmatprep.subr.bf16.mxu0 0
      %697 = vmatpush1.bf16.msra.mxu0 0
      %698 = vmatprep.subr.bf16.mxu0 0
      %699 = vmatpush1.bf16.msra.mxu0 0
      %700 = vmatprep.subr.bf16.mxu0 0
      %701 = vmatpush1.bf16.msra.mxu0 0
      %702 = vmatprep.subr.bf16.mxu0 0
      %703 = vmatpush1.bf16.msra.mxu0 0
      %704 = vmatprep.mubr.bf16.mxu0 0
      %705 = vmatmul.mubr.bf16.gmra.mrb[0].mxu0 %v670
      %v706 = vpop.f32.mrb[0].mxu0
      %v707 = vadd.f32 %v184, %v706
      %v708 = vpop.f32.mrb[0].mxu0
      %v709 = vadd.f32 %v188, %v708
      %v710 = vpop.f32.mrb[0].mxu0
      %v711 = vadd.f32 %v184, %v710
      %v712 = vpop.f32.mrb[0].mxu0
      %v713 = vadd.f32 %v188, %v712
      %714 = vdwg.mxu0
      %715 = vmatprep.subr.bf16.mxu0 %v373
      %716 = vmatpush1.bf16.msra.mxu0 %v372
      %717 = vmatprep.subr.bf16.mxu0 %v381
      %718 = vmatpush1.bf16.msra.mxu0 %v380
      %719 = vmatprep.subr.bf16.mxu0 %v389
      %720 = vmatpush1.bf16.msra.mxu0 %v388
      %721 = vmatprep.subr.bf16.mxu0 %v397
      %722 = vmatpush1.bf16.msra.mxu0 %v396
      %723 = vmatprep.subr.bf16.mxu0 %v405
      %724 = vmatpush1.bf16.msra.mxu0 %v404
      %725 = vmatprep.subr.bf16.mxu0 %v413
      %726 = vmatpush1.bf16.msra.mxu0 %v412
      %727 = vmatprep.subr.bf16.mxu0 0
      %728 = vmatpush1.bf16.msra.mxu0 0
      %729 = vmatprep.subr.bf16.mxu0 0
      %730 = vmatpush1.bf16.msra.mxu0 0
      %731 = vmatprep.subr.bf16.mxu0 0
      %732 = vmatpush1.bf16.msra.mxu0 0
      %733 = vmatprep.subr.bf16.mxu0 0
      %734 = vmatpush1.bf16.msra.mxu0 0
      %735 = vmatprep.subr.bf16.mxu0 0
      %736 = vmatpush1.bf16.msra.mxu0 0
      %737 = vmatprep.subr.bf16.mxu0 0
      %738 = vmatpush1.bf16.msra.mxu0 0
      %739 = vmatprep.subr.bf16.mxu0 0
      %740 = vmatpush1.bf16.msra.mxu0 0
      %741 = vmatprep.subr.bf16.mxu0 0
      %742 = vmatpush1.bf16.msra.mxu0 0
      %743 = vmatprep.subr.bf16.mxu0 0
      %744 = vmatpush1.bf16.msra.mxu0 0
      %745 = vmatprep.subr.bf16.mxu0 0
      %746 = vmatpush1.bf16.msra.mxu0 0
      %747 = vmatprep.mubr.bf16.mxu0 0
      %748 = vmatmul.mubr.bf16.gmra.mrb[0].mxu0 %v670
      %v749 = vpop.f32.mrb[0].mxu0
      %v750 = vadd.f32 %v192, %v749
      %v751 = vpop.f32.mrb[0].mxu0
      %v752 = vadd.f32 %v196, %v751
      %v753 = vpop.f32.mrb[0].mxu0
      %v754 = vadd.f32 %v192, %v753
      %v755 = vpop.f32.mrb[0].mxu0
      %v756 = vadd.f32 %v196, %v755
      %757 = vdwg.mxu0
      %758 = vmatprep.subr.bf16.mxu0 %v375
      %759 = vmatpush1.bf16.msra.mxu0 %v374
      %760 = vmatprep.subr.bf16.mxu0 %v383
      %761 = vmatpush1.bf16.msra.mxu0 %v382
      %762 = vmatprep.subr.bf16.mxu0 %v391
      %763 = vmatpush1.bf16.msra.mxu0 %v390
      %764 = vmatprep.subr.bf16.mxu0 %v399
      %765 = vmatpush1.bf16.msra.mxu0 %v398
      %766 = vmatprep.subr.bf16.mxu0 %v407
      %767 = vmatpush1.bf16.msra.mxu0 %v406
      %768 = vmatprep.subr.bf16.mxu0 %v415
      %769 = vmatpush1.bf16.msra.mxu0 %v414
      %770 = vmatprep.subr.bf16.mxu0 0
      %771 = vmatpush1.bf16.msra.mxu0 0
      %772 = vmatprep.subr.bf16.mxu0 0
      %773 = vmatpush1.bf16.msra.mxu0 0
      %774 = vmatprep.subr.bf16.mxu0 0
      %775 = vmatpush1.bf16.msra.mxu0 0
      %776 = vmatprep.subr.bf16.mxu0 0
      %777 = vmatpush1.bf16.msra.mxu0 0
      %778 = vmatprep.subr.bf16.mxu0 0
      %779 = vmatpush1.bf16.msra.mxu0 0
      %780 = vmatprep.subr.bf16.mxu0 0
      %781 = vmatpush1.bf16.msra.mxu0 0
      %782 = vmatprep.subr.bf16.mxu0 0
      %783 = vmatpush1.bf16.msra.mxu0 0
      %784 = vmatprep.subr.bf16.mxu0 0
      %785 = vmatpush1.bf16.msra.mxu0 0
      %786 = vmatprep.subr.bf16.mxu0 0
      %787 = vmatpush1.bf16.msra.mxu0 0
      %788 = vmatprep.subr.bf16.mxu0 0
      %789 = vmatpush1.bf16.msra.mxu0 0
      %790 = vmatprep.mubr.bf16.mxu0 0
      %791 = vmatmul.mubr.bf16.gmra.mrb[0].mxu0 %v670
      %v792 = vpop.f32.mrb[0].mxu0
      %v793 = vadd.f32 %v200, %v792
      %v794 = vpop.f32.mrb[0].mxu0
      %v795 = vadd.f32 %v204, %v794
      %v796 = vpop.f32.mrb[0].mxu0
      %v797 = vadd.f32 %v200, %v796
      %v798 = vpop.f32.mrb[0].mxu0
      %v799 = vadd.f32 %v204, %v798
      %800 = vdwg.mxu0
      %801 = vmatprep.subr.bf16.mxu0 %v377
      %802 = vmatpush1.bf16.msra.mxu0 %v376
      %803 = vmatprep.subr.bf16.mxu0 %v385
      %804 = vmatpush1.bf16.msra.mxu0 %v384
      %805 = vmatprep.subr.bf16.mxu0 %v393
      %806 = vmatpush1.bf16.msra.mxu0 %v392
      %807 = vmatprep.subr.bf16.mxu0 %v401
      %808 = vmatpush1.bf16.msra.mxu0 %v400
      %809 = vmatprep.subr.bf16.mxu0 %v409
      %810 = vmatpush1.bf16.msra.mxu0 %v408
      %811 = vmatprep.subr.bf16.mxu0 %v417
      %812 = vmatpush1.bf16.msra.mxu0 %v416
      %813 = vmatprep.subr.bf16.mxu0 0
      %814 = vmatpush1.bf16.msra.mxu0 0
      %815 = vmatprep.subr.bf16.mxu0 0
      %816 = vmatpush1.bf16.msra.mxu0 0
      %817 = vmatprep.subr.bf16.mxu0 0
      %818 = vmatpush1.bf16.msra.mxu0 0
      %819 = vmatprep.subr.bf16.mxu0 0
      %820 = vmatpush1.bf16.msra.mxu0 0
      %821 = vmatprep.subr.bf16.mxu0 0
      %822 = vmatpush1.bf16.msra.mxu0 0
      %823 = vmatprep.subr.bf16.mxu0 0
      %824 = vmatpush1.bf16.msra.mxu0 0
      %825 = vmatprep.subr.bf16.mxu0 0
      %826 = vmatpush1.bf16.msra.mxu0 0
      %827 = vmatprep.subr.bf16.mxu0 0
      %828 = vmatpush1.bf16.msra.mxu0 0
      %829 = vmatprep.subr.bf16.mxu0 0
      %830 = vmatpush1.bf16.msra.mxu0 0
      %831 = vmatprep.subr.bf16.mxu0 0
      %832 = vmatpush1.bf16.msra.mxu0 0
      %833 = vmatprep.mubr.bf16.mxu0 0
      %834 = vmatmul.mubr.bf16.gmra.mrb[0].mxu0 %v670
      %v835 = vpop.f32.mrb[0].mxu0
      %v836 = vadd.f32 %v208, %v835
      %v837 = vpop.f32.mrb[0].mxu0
      %v838 = vadd.f32 %v212, %v837
      %v839 = vpop.f32.mrb[0].mxu0
      %v840 = vadd.f32 %v208, %v839
      %v841 = vpop.f32.mrb[0].mxu0
      %v842 = vadd.f32 %v212, %v841
      %843 = vdwg.mxu0
      %v844 = vmax.f32 %v707, 0.0
      %v845 = vmax.f32 %v709, 0.0
      %v846 = vmax.f32 %v750, 0.0
      %v847 = vmax.f32 %v752, 0.0
      %v848 = vmax.f32 %v793, 0.0
      %v849 = vmax.f32 %v795, 0.0
      %v850 = vmax.f32 %v836, 0.0
      %v851 = vmax.f32 %v838, 0.0
      %v852 = vmax.f32 %v711, 0.0
      %v853 = vmax.f32 %v713, 0.0
      %v854 = vmax.f32 %v754, 0.0
      %v855 = vmax.f32 %v756, 0.0
      %v856 = vmax.f32 %v797, 0.0
      %v857 = vmax.f32 %v799, 0.0
      %v858 = vmax.f32 %v840, 0.0
      %v859 = vmax.f32 %v842, 0.0
      %v860 = vmax.f32 %v642, %v844
      %v861 = vmax.f32 %v643, %v845
      %v862 = vmax.f32 %v644, %v846
      %v863 = vmax.f32 %v645, %v847
      %v864 = vmax.f32 %v646, %v848
      %v865 = vmax.f32 %v647, %v849
      %v866 = vmax.f32 %v648, %v850
      %v867 = vmax.f32 %v649, %v851
      %v868 = vmax.f32 %v650, %v852
      %v869 = vmax.f32 %v651, %v853
      %v870 = vmax.f32 %v652, %v854
      %v871 = vmax.f32 %v653, %v855
      %v872 = vmax.f32 %v654, %v856
      %v873 = vmax.f32 %v655, %v857
      %v874 = vmax.f32 %v656, %v858
      %v875 = vmax.f32 %v657, %v859
      %v876 = vmax.f32 %v860, %v864
      %v877 = vmax.f32 %v861, %v865
      %v878 = vmax.f32 %v862, %v866
      %v879 = vmax.f32 %v863, %v867
      %v880 = vmax.f32 %v868, %v872
      %v881 = vmax.f32 %v869, %v873
      %v882 = vmax.f32 %v870, %v874
      %v883 = vmax.f32 %v871, %v875
      %v884 = vpack.c.bf16 %v880, %v876
      %v885 = vpack.c.bf16 %v881, %v877
      %v886 = vpack.c.bf16 %v882, %v878
      %v887 = vpack.c.bf16 %v883, %v879
      %s888 = smul.u32 %s118, 64
      %s889 = smul.addr %s888, 4
      %s890 = scalar_lea.vmem [#allocation8], %s889
      %v891 = vld [vmem:[%s890] sm:$0xf]
      %v892 = vld [vmem:[%s890 + $0x4] sm:$0xf]
      %v893 = vld [vmem:[%s890 + $0x8] sm:$0xf]
      %v894 = vld [vmem:[%s890 + $0xc] sm:$0xf]
      %v895 = vld [vmem:[%s890 + $0x10] sm:$0xf]
      %v896 = vld [vmem:[%s890 + $0x14] sm:$0xf]
      %v897 = vld [vmem:[%s890 + $0x18] sm:$0xf]
      %v898 = vld [vmem:[%s890 + $0x1c] sm:$0xf]
      %v899 = vld [vmem:[%s890 + $0x20] sm:$0xf]
      %v900 = vld [vmem:[%s890 + $0x24] sm:$0xf]
      %v901 = vld [vmem:[%s890 + $0x28] sm:$0xf]
      %v902 = vld [vmem:[%s890 + $0x2c] sm:$0xf]
      %v903 = vld [vmem:[%s890 + $0x30] sm:$0xf]
      %v904 = vld [vmem:[%s890 + $0x34] sm:$0xf]
      %v905 = vld [vmem:[%s890 + $0x38] sm:$0xf]
      %v906 = vld [vmem:[%s890 + $0x3c] sm:$0xf]
      %v907 = vld [vmem:[%s890 + $0x40] sm:$0xf]
      %v908 = vld [vmem:[%s890 + $0x44] sm:$0xf]
      %v909 = vld [vmem:[%s890 + $0x48] sm:$0xf]
      %v910 = vld [vmem:[%s890 + $0x4c] sm:$0xf]
      %v911 = vld [vmem:[%s890 + $0x50] sm:$0xf]
      %v912 = vld [vmem:[%s890 + $0x54] sm:$0xf]
      %v913 = vld [vmem:[%s890 + $0x58] sm:$0xf]
      %v914 = vld [vmem:[%s890 + $0x5c] sm:$0xf]
      %v915 = vld [vmem:[%s890 + $0x60] sm:$0xf]
      %v916 = vld [vmem:[%s890 + $0x64] sm:$0xf]
      %v917 = vld [vmem:[%s890 + $0x68] sm:$0xf]
      %v918 = vld [vmem:[%s890 + $0x6c] sm:$0xf]
      %v919 = vld [vmem:[%s890 + $0x70] sm:$0xf]
      %v920 = vld [vmem:[%s890 + $0x74] sm:$0xf]
      %v921 = vld [vmem:[%s890 + $0x78] sm:$0xf]
      %v922 = vld [vmem:[%s890 + $0x7c] sm:$0xf]
      %v923 = vld [vmem:[%s890 + $0x80] sm:$0xf]
      %v924 = vld [vmem:[%s890 + $0x84] sm:$0xf]
      %v925 = vld [vmem:[%s890 + $0x88] sm:$0xf]
      %v926 = vld [vmem:[%s890 + $0x8c] sm:$0xf]
      %v927 = vld [vmem:[%s890 + $0x90] sm:$0xf]
      %v928 = vld [vmem:[%s890 + $0x94] sm:$0xf]
      %v929 = vld [vmem:[%s890 + $0x98] sm:$0xf]
      %v930 = vld [vmem:[%s890 + $0x9c] sm:$0xf]
      %v931 = vld [vmem:[%s890 + $0xa0] sm:$0xf]
      %v932 = vld [vmem:[%s890 + $0xa4] sm:$0xf]
      %v933 = vld [vmem:[%s890 + $0xa8] sm:$0xf]
      %v934 = vld [vmem:[%s890 + $0xac] sm:$0xf]
      %v935 = vld [vmem:[%s890 + $0xb0] sm:$0xf]
      %v936 = vld [vmem:[%s890 + $0xb4] sm:$0xf]
      %v937 = vld [vmem:[%s890 + $0xb8] sm:$0xf]
      %v938 = vld [vmem:[%s890 + $0xbc] sm:$0xf]
      %v939 = vld [vmem:[%s890 + $0xc0] sm:$0xf]
      %v940 = vld [vmem:[%s890 + $0xc4] sm:$0xf]
      %v941 = vld [vmem:[%s890 + $0xc8] sm:$0xf]
      %v942 = vld [vmem:[%s890 + $0xcc] sm:$0xf]
      %v943 = vld [vmem:[%s890 + $0xd0] sm:$0xf]
      %v944 = vld [vmem:[%s890 + $0xd4] sm:$0xf]
      %v945 = vld [vmem:[%s890 + $0xd8] sm:$0xf]
      %v946 = vld [vmem:[%s890 + $0xdc] sm:$0xf]
      %v947 = vld [vmem:[%s890 + $0xe0] sm:$0xf]
      %v948 = vld [vmem:[%s890 + $0xe4] sm:$0xf]
      %v949 = vld [vmem:[%s890 + $0xe8] sm:$0xf]
      %v950 = vld [vmem:[%s890 + $0xec] sm:$0xf]
      %v951 = vld [vmem:[%s890 + $0xf0] sm:$0xf]
      %v952 = vld [vmem:[%s890 + $0xf4] sm:$0xf]
      %v953 = vld [vmem:[%s890 + $0xf8] sm:$0xf]
      %v954 = vld [vmem:[%s890 + $0xfc] sm:$0xf]
      %v1019 = vunpack.c.l.b16 %v891
      %v1020 = vunpack.c.l.b16 %v892
      %v1021 = vunpack.c.l.b16 %v893
      %v1022 = vunpack.c.l.b16 %v894
      %v1023 = vunpack.c.l.b16 %v895
      %v1024 = vunpack.c.l.b16 %v896
      %v1025 = vunpack.c.l.b16 %v897
      %v1026 = vunpack.c.l.b16 %v898
      %v1027 = vunpack.c.l.b16 %v899
      %v1028 = vunpack.c.l.b16 %v900
      %v1029 = vunpack.c.l.b16 %v901
      %v1030 = vunpack.c.l.b16 %v902
      %v1031 = vunpack.c.l.b16 %v903
      %v1032 = vunpack.c.l.b16 %v904
      %v1033 = vunpack.c.l.b16 %v905
      %v1034 = vunpack.c.l.b16 %v906
      %v1035 = vunpack.c.l.b16 %v907
      %v1036 = vunpack.c.l.b16 %v908
      %v1037 = vunpack.c.l.b16 %v909
      %v1038 = vunpack.c.l.b16 %v910
      %v1039 = vunpack.c.l.b16 %v911
      %v1040 = vunpack.c.l.b16 %v912
      %v1041 = vunpack.c.l.b16 %v913
      %v1042 = vunpack.c.l.b16 %v914
      %v1043 = vunpack.c.l.b16 %v915
      %v1044 = vunpack.c.l.b16 %v916
      %v1045 = vunpack.c.l.b16 %v917
      %v1046 = vunpack.c.l.b16 %v918
      %v1047 = vunpack.c.l.b16 %v919
      %v1048 = vunpack.c.l.b16 %v920
      %v1049 = vunpack.c.l.b16 %v921
      %v1050 = vunpack.c.l.b16 %v922
      %v1051 = vunpack.c.l.b16 %v923
      %v1052 = vunpack.c.l.b16 %v924
      %v1053 = vunpack.c.l.b16 %v925
      %v1054 = vunpack.c.l.b16 %v926
      %v1055 = vunpack.c.l.b16 %v927
      %v1056 = vunpack.c.l.b16 %v928
      %v1057 = vunpack.c.l.b16 %v929
      %v1058 = vunpack.c.l.b16 %v930
      %v1059 = vunpack.c.l.b16 %v931
      %v1060 = vunpack.c.l.b16 %v932
      %v1061 = vunpack.c.l.b16 %v933
      %v1062 = vunpack.c.l.b16 %v934
      %v1063 = vunpack.c.l.b16 %v935
      %v1064 = vunpack.c.l.b16 %v936
      %v1065 = vunpack.c.l.b16 %v937
      %v1066 = vunpack.c.l.b16 %v938
      %v1067 = vunpack.c.l.b16 %v939
      %v1068 = vunpack.c.l.b16 %v940
      %v1069 = vunpack.c.l.b16 %v941
      %v1070 = vunpack.c.l.b16 %v942
      %v1071 = vunpack.c.l.b16 %v943
      %v1072 = vunpack.c.l.b16 %v944
      %v1073 = vunpack.c.l.b16 %v945
      %v1074 = vunpack.c.l.b16 %v946
      %v1075 = vunpack.c.l.b16 %v947
      %v1076 = vunpack.c.l.b16 %v948
      %v1077 = vunpack.c.l.b16 %v949
      %v1078 = vunpack.c.l.b16 %v950
      %v1079 = vunpack.c.l.b16 %v951
      %v1080 = vunpack.c.l.b16 %v952
      %v1081 = vunpack.c.l.b16 %v953
      %v1082 = vunpack.c.l.b16 %v954
      %v1083 = vpack.c.b16 %v1020, %v1019
      %v1084 = vpack.c.b16 %v1022, %v1021
      %v1085 = vpack.c.b16 %v1024, %v1023
      %v1086 = vpack.c.b16 %v1026, %v1025
      %v1087 = vpack.c.b16 %v1028, %v1027
      %v1088 = vpack.c.b16 %v1030, %v1029
      %v1089 = vpack.c.b16 %v1032, %v1031
      %v1090 = vpack.c.b16 %v1034, %v1033
      %v1091 = vpack.c.b16 %v1036, %v1035
      %v1092 = vpack.c.b16 %v1038, %v1037
      %v1093 = vpack.c.b16 %v1040, %v1039
      %v1094 = vpack.c.b16 %v1042, %v1041
      %v1095 = vpack.c.b16 %v1044, %v1043
      %v1096 = vpack.c.b16 %v1046, %v1045
      %v1097 = vpack.c.b16 %v1048, %v1047
      %v1098 = vpack.c.b16 %v1050, %v1049
      %v1099 = vpack.c.b16 %v1052, %v1051
      %v1100 = vpack.c.b16 %v1054, %v1053
      %v1101 = vpack.c.b16 %v1056, %v1055
      %v1102 = vpack.c.b16 %v1058, %v1057
      %v1103 = vpack.c.b16 %v1060, %v1059
      %v1104 = vpack.c.b16 %v1062, %v1061
      %v1105 = vpack.c.b16 %v1064, %v1063
      %v1106 = vpack.c.b16 %v1066, %v1065
      %v1107 = vpack.c.b16 %v1068, %v1067
      %v1108 = vpack.c.b16 %v1070, %v1069
      %v1109 = vpack.c.b16 %v1072, %v1071
      %v1110 = vpack.c.b16 %v1074, %v1073
      %v1111 = vpack.c.b16 %v1076, %v1075
      %v1112 = vpack.c.b16 %v1078, %v1077
      %v1113 = vpack.c.b16 %v1080, %v1079
      %v1114 = vpack.c.b16 %v1082, %v1081
      %1147 = vmatprep.subr.bf16.mxu0 0
      %1148 = vmatpush1.bf16.msra.mxu0 %v1083
      %1149 = vmatprep.subr.bf16.mxu0 0
      %1150 = vmatpush1.bf16.msra.mxu0 %v1084
      %1151 = vmatprep.subr.bf16.mxu0 0
      %1152 = vmatpush1.bf16.msra.mxu0 %v1085
      %1153 = vmatprep.subr.bf16.mxu0 0
      %1154 = vmatpush1.bf16.msra.mxu0 %v1086
      %1155 = vmatprep.subr.bf16.mxu0 0
      %1156 = vmatpush1.bf16.msra.mxu0 %v1087
      %1157 = vmatprep.subr.bf16.mxu0 0
      %1158 = vmatpush1.bf16.msra.mxu0 %v1088
      %1159 = vmatprep.subr.bf16.mxu0 0
      %1160 = vmatpush1.bf16.msra.mxu0 %v1089
      %1161 = vmatprep.subr.bf16.mxu0 0
      %1162 = vmatpush1.bf16.msra.mxu0 %v1090
      %1163 = vmatprep.subr.bf16.mxu0 0
      %1164 = vmatpush1.bf16.msra.mxu0 %v1091
      %1165 = vmatprep.subr.bf16.mxu0 0
      %1166 = vmatpush1.bf16.msra.mxu0 %v1092
      %1167 = vmatprep.subr.bf16.mxu0 0
      %1168 = vmatpush1.bf16.msra.mxu0 %v1093
      %1169 = vmatprep.subr.bf16.mxu0 0
      %1170 = vmatpush1.bf16.msra.mxu0 %v1094
      %1171 = vmatprep.subr.bf16.mxu0 0
      %1172 = vmatpush1.bf16.msra.mxu0 %v1095
      %1173 = vmatprep.subr.bf16.mxu0 0
      %1174 = vmatpush1.bf16.msra.mxu0 %v1096
      %1175 = vmatprep.subr.bf16.mxu0 0
      %1176 = vmatpush1.bf16.msra.mxu0 %v1097
      %1177 = vmatprep.subr.bf16.mxu0 0
      %1178 = vmatpush1.bf16.msra.mxu0 %v1098
      %1179 = vmatprep.mubr.bf16.mxu0 %v885
      %1180 = vmatmul.mubr.bf16.gmra.mrb[0].mxu0 %v884
      %v1181 = vpop.f32.mrb[0].mxu0
      %v1182 = vadd.f32 0.0, %v1181
      %v1183 = vpop.f32.mrb[0].mxu0
      %v1184 = vpop.f32.mrb[0].mxu0
      %v1185 = vadd.f32 0.0, %v1184
      %v1186 = vpop.f32.mrb[0].mxu0
      %1187 = vdwg.mxu0
      %1188 = vmatprep.subr.bf16.mxu0 0
      %1189 = vmatpush1.bf16.msra.mxu0 %v1099
      %1190 = vmatprep.subr.bf16.mxu0 0
      %1191 = vmatpush1.bf16.msra.mxu0 %v1100
      %1192 = vmatprep.subr.bf16.mxu0 0
      %1193 = vmatpush1.bf16.msra.mxu0 %v1101
      %1194 = vmatprep.subr.bf16.mxu0 0
      %1195 = vmatpush1.bf16.msra.mxu0 %v1102
      %1196 = vmatprep.subr.bf16.mxu0 0
      %1197 = vmatpush1.bf16.msra.mxu0 %v1103
      %1198 = vmatprep.subr.bf16.mxu0 0
      %1199 = vmatpush1.bf16.msra.mxu0 %v1104
      %1200 = vmatprep.subr.bf16.mxu0 0
      %1201 = vmatpush1.bf16.msra.mxu0 %v1105
      %1202 = vmatprep.subr.bf16.mxu0 0
      %1203 = vmatpush1.bf16.msra.mxu0 %v1106
      %1204 = vmatprep.subr.bf16.mxu0 0
      %1205 = vmatpush1.bf16.msra.mxu0 %v1107
      %1206 = vmatprep.subr.bf16.mxu0 0
      %1207 = vmatpush1.bf16.msra.mxu0 %v1108
      %1208 = vmatprep.subr.bf16.mxu0 0
      %1209 = vmatpush1.bf16.msra.mxu0 %v1109
      %1210 = vmatprep.subr.bf16.mxu0 0
      %1211 = vmatpush1.bf16.msra.mxu0 %v1110
      %1212 = vmatprep.subr.bf16.mxu0 0
      %1213 = vmatpush1.bf16.msra.mxu0 %v1111
      %1214 = vmatprep.subr.bf16.mxu0 0
      %1215 = vmatpush1.bf16.msra.mxu0 %v1112
      %1216 = vmatprep.subr.bf16.mxu0 0
      %1217 = vmatpush1.bf16.msra.mxu0 %v1113
      %1218 = vmatprep.subr.bf16.mxu0 0
      %1219 = vmatpush1.bf16.msra.mxu0 %v1114
      %1220 = vmatprep.mubr.bf16.mxu0 %v887
      %1221 = vmatmul.mubr.bf16.gmra.mrb[0].mxu0 %v886
      %v1222 = vpop.f32.mrb[0].mxu0
      %v1223 = vadd.f32 %v1182, %v1222
      %v1224 = vpop.f32.mrb[0].mxu0
      %v1225 = vpop.f32.mrb[0].mxu0
      %v1226 = vadd.f32 %v1185, %v1225
      %v1227 = vpop.f32.mrb[0].mxu0
      %1228 = vdwg.mxu0
      %v1229 = vadd.f32 %v123, %v1223
      %v1230 = vadd.f32 %v124, %v1226
    $region62: #{tpu_custom_call.1} parent=1 // loop_footer
      %s122 = sadd.s32 1, %s118
    $region63: #{tpu_custom_call.1} parent=1 // loop_footer_branch
      %117 = sbr.rel target = $region59
    $region64: #{tpu_custom_call.1} parent=1 // loop_exit
      _
    %v1231 = vld [vmem:[#allocation10] sm:$0x1]
    %v1233 = vlaneseq
    %v1234 = vshrl.u32 %v1233, 7
    %v1235 = vsub.s32 0, %v1234
    %v1236 = vrot.slane %v1231, %v1235
    %v1238 = vadd.f32 %v123, %v1236
    %v1239 = vadd.f32 %v124, %v1236
    %v1240 = vmax.f32 %v1238, 0.0
    %v1241 = vmax.f32 %v1239, 0.0
    %v1242 = vpack.c.bf16 %v1241, %v1240
    %v1243 = vld [vmem:[#allocation11] sm:$0xf]
    %v1244 = vld [vmem:[#allocation11 + $0x4] sm:$0xf]
    %v1245 = vld [vmem:[#allocation11 + $0x8] sm:$0xf]
    %v1246 = vld [vmem:[#allocation11 + $0xc] sm:$0xf]
    %v1247 = vld [vmem:[#allocation11 + $0x10] sm:$0xf]
    %v1248 = vld [vmem:[#allocation11 + $0x14] sm:$0xf]
    %v1249 = vld [vmem:[#allocation11 + $0x18] sm:$0xf]
    %v1250 = vld [vmem:[#allocation11 + $0x1c] sm:$0xf]
    %v1251 = vld [vmem:[#allocation11 + $0x20] sm:$0xf]
    %v1252 = vld [vmem:[#allocation11 + $0x24] sm:$0xf]
    %v1253 = vld [vmem:[#allocation11 + $0x28] sm:$0xf]
    %v1254 = vld [vmem:[#allocation11 + $0x2c] sm:$0xf]
    %v1255 = vld [vmem:[#allocation11 + $0x30] sm:$0xf]
    %v1256 = vld [vmem:[#allocation11 + $0x34] sm:$0xf]
    %v1257 = vld [vmem:[#allocation11 + $0x38] sm:$0xf]
    %v1258 = vld [vmem:[#allocation11 + $0x3c] sm:$0xf]
    %v1259 = vld [vmem:[#allocation13] sm:$0x1]
    %v1261 = vlaneseq
    %v1262 = vshrl.u32 %v1261, 7
    %v1263 = vsub.s32 0, %v1262
    %v1264 = vrot.slane %v1259, %v1263
    %v1282 = vunpack.c.l.b16 %v1243
    %v1283 = vunpack.c.l.b16 %v1244
    %v1284 = vunpack.c.l.b16 %v1245
    %v1285 = vunpack.c.l.b16 %v1246
    %v1286 = vunpack.c.l.b16 %v1247
    %v1287 = vunpack.c.l.b16 %v1248
    %v1288 = vunpack.c.l.b16 %v1249
    %v1289 = vunpack.c.l.b16 %v1250
    %v1290 = vunpack.c.l.b16 %v1251
    %v1291 = vunpack.c.l.b16 %v1252
    %v1292 = vunpack.c.l.b16 %v1253
    %v1293 = vunpack.c.l.b16 %v1254
    %v1294 = vunpack.c.l.b16 %v1255
    %v1295 = vunpack.c.l.b16 %v1256
    %v1296 = vunpack.c.l.b16 %v1257
    %v1297 = vunpack.c.l.b16 %v1258
    %v1298 = vpack.c.b16 %v1283, %v1282
    %v1299 = vpack.c.b16 %v1285, %v1284
    %v1300 = vpack.c.b16 %v1287, %v1286
    %v1301 = vpack.c.b16 %v1289, %v1288
    %v1302 = vpack.c.b16 %v1291, %v1290
    %v1303 = vpack.c.b16 %v1293, %v1292
    %v1304 = vpack.c.b16 %v1295, %v1294
    %v1305 = vpack.c.b16 %v1297, %v1296
    %1314 = vmatprep.subr.bf16.mxu0 0
    %1315 = vmatpush1.bf16.msra.mxu0 %v1298
    %1316 = vmatprep.subr.bf16.mxu0 0
    %1317 = vmatpush1.bf16.msra.mxu0 %v1299
    %1318 = vmatprep.subr.bf16.mxu0 0
    %1319 = vmatpush1.bf16.msra.mxu0 %v1300
    %1320 = vmatprep.subr.bf16.mxu0 0
    %1321 = vmatpush1.bf16.msra.mxu0 %v1301
    %1322 = vmatprep.subr.bf16.mxu0 0
    %1323 = vmatpush1.bf16.msra.mxu0 %v1302
    %1324 = vmatprep.subr.bf16.mxu0 0
    %1325 = vmatpush1.bf16.msra.mxu0 %v1303
    %1326 = vmatprep.subr.bf16.mxu0 0
    %1327 = vmatpush1.bf16.msra.mxu0 %v1304
    %1328 = vmatprep.subr.bf16.mxu0 0
    %1329 = vmatpush1.bf16.msra.mxu0 %v1305
    %1330 = vmatprep.subr.bf16.mxu0 0
    %1331 = vmatpush1.bf16.msra.mxu0 0
    %1332 = vmatprep.subr.bf16.mxu0 0
    %1333 = vmatpush1.bf16.msra.mxu0 0
    %1334 = vmatprep.subr.bf16.mxu0 0
    %1335 = vmatpush1.bf16.msra.mxu0 0
    %1336 = vmatprep.subr.bf16.mxu0 0
    %1337 = vmatpush1.bf16.msra.mxu0 0
    %1338 = vmatprep.subr.bf16.mxu0 0
    %1339 = vmatpush1.bf16.msra.mxu0 0
    %1340 = vmatprep.subr.bf16.mxu0 0
    %1341 = vmatpush1.bf16.msra.mxu0 0
    %1342 = vmatprep.subr.bf16.mxu0 0
    %1343 = vmatpush1.bf16.msra.mxu0 0
    %1344 = vmatprep.subr.bf16.mxu0 0
    %1345 = vmatpush1.bf16.msra.mxu0 0
    %1346 = vmatprep.mubr.bf16.mxu0 0
    %1347 = vmatmul.mubr.bf16.gmra.mrb[0].mxu0 %v1242
    %v1348 = vpop.f32.mrb[0].mxu0
    %v1349 = vadd.f32 %v1264, %v1348
    %v1350 = vpop.f32.mrb[0].mxu0
    %v1351 = vpop.f32.mrb[0].mxu0
    %v1352 = vadd.f32 %v1264, %v1351
    %v1353 = vpop.f32.mrb[0].mxu0
    %1354 = vdwg.mxu0
    %1355 = vst [vmem:[#allocation14] sm:$0xff] %v1349
    %1356 = vst [vmem:[#allocation14 + $0x8] sm:$0xff] %v1352
    // Predicated region
    $region65: #{tpu_custom_call.1} parent=1 // pred_check
      _
    $region66: #{tpu_custom_call.1} parent=1 // pred_check_branch
      %1358 = sbr.rel (0) target = $region68
    $region67: #{tpu_custom_call.1} parent=1 // pred_region
      %s1360 = ssub.s32 256, 256
      %1361 = vsyncadd [#allocation4], %s1360
      %s1362 = sshll.u32 [#allocation14], 4
      %s1363 = int_to_ptr.vmem [resolvable:$true] %s1362
      %1368 = dma.vmem_to_hbm [thread:$0]  %s1363, 256, %s7, [#allocation4], 128, 128, 8
    $region68: #{tpu_custom_call.1} parent=1 // pred_fallthru
      _
    // Predicated region
    $region69: #{tpu_custom_call.1} parent=1 // pred_check
      _
    $region70: #{tpu_custom_call.1} parent=1 // pred_check_branch
      %1370 = sbr.rel (0) target = $region72
    $region71: #{tpu_custom_call.1} parent=1 // pred_region
      %1371 = dma.done [#allocation4], 256
    $region72: #{tpu_custom_call.1} parent=1 // pred_fallthru
      _
    %1372 = vsyncpa [#allocation3], 1
    %1373 = vsyncpa [#allocation6], 1
    %1374 = vsyncpa [#allocation9], 1
    %1375 = vsyncpa [#allocation12], 1
    %1376 = vsyncpa [#allocation4], 1

</llo_original>
